<compile_context>
chip_gen: v6e
topology: v6e:2x2x1
jax: 0.10.0
libtpu: 0.0.40
codegen_flags: <defaults>
</compile_context>

<pallas_src>
import jax
import jax.numpy as jnp
from jax import lax
from jax.experimental import pallas as pl
from jax.experimental.pallas import tpu as pltpu


# ---------------------------------------------------------------------------
# Pallas grouped-GEMM expert kernel
# ---------------------------------------------------------------------------
def _moe_gmm_kernel(be_ref, nu_ref, x_ref, w1_ref, v1_ref, w2_ref, rw_ref,
                    out_ref, acc_ref):
    b = pl.program_id(0)          # token block (sorted/padded by expert)
    f = pl.program_id(1)          # ffn-hidden chunk (reduction axis, innermost)
    n_f = pl.num_programs(1)

    @pl.when(f == 0)
    def _init():
        acc_ref[...] = jnp.zeros_like(acc_ref)

    # Skip compute for the trailing padding-only blocks (b >= #used blocks).
    @pl.when(b < nu_ref[0])
    def _work():
        x = x_ref[...]                                    # (tm, H)   act dtype
        w1 = w1_ref[0]                                    # (tf, H)
        v1 = v1_ref[0]                                    # (tf, H)
        w2 = w2_ref[0]                                    # (tf, H)

        # gate/up: contract H of both operands (x @ w^T) -- no weight transpose.
        nt = (((1,), (1,)), ((), ()))
        gate = lax.dot_general(x, w1, nt, preferred_element_type=jnp.float32)
        up = lax.dot_general(x, v1, nt, preferred_element_type=jnp.float32)
        inter = (gate * jax.nn.sigmoid(gate)) * up        # SiLU(gate) * up, f32

        # Per-row routing weight (f32, (tm,1)); scaling the (tm,tf) operand is
        # cheaper than scaling the (tm,H) result and keeps the MXU inputs narrow.
        scaled = (inter * rw_ref[...]).astype(x.dtype)

        acc_ref[...] += jnp.dot(scaled, w2, preferred_element_type=jnp.float32)

    @pl.when(f == n_f - 1)
    def _store():
        out_ref[...] = acc_ref[...].astype(out_ref.dtype)


# ---------------------------------------------------------------------------
# Tiling helpers (generation-aware, consistent with vmem_limit_bytes)
# ---------------------------------------------------------------------------
def _round_up(x, m):
    return ((x + m - 1) // m) * m


def _vmem_capacity():
    try:
        return int(pltpu.get_tpu_info().vmem_capacity_bytes)
    except Exception:
        return 64 * 1024 * 1024          # conservative (v7x per-core) fallback


def _tile_vmem_bytes(tm, tf, H, x_bytes, w_bytes):
    """Estimated VMEM working set incl. compiler-materialized intermediates."""
    x_tiles = 2 * tm * H * x_bytes              # double-buffered x tile
    o_tiles = 2 * tm * H * x_bytes              # double-buffered out tile
    w_tiles = 3 * 2 * tf * H * w_bytes          # w1/v1/w2 chunks, double-buffered
    acc = tm * H * 4                            # f32 accumulator scratch
    mids = 4 * tm * tf * 4                      # gate/up/inter/scaled f32 temps
    rows = 4 * tm * 4                           # routing-weight tiles
    return x_tiles + o_tiles + w_tiles + acc + mids + rows


def _pick_tiles(TK, H, F, x_bytes, w_bytes):
    vmem = _vmem_capacity()
    budget = int(vmem * 0.72)                   # pipeline/compiler headroom

    # Token tile: big on 128 MiB parts (v5e/v6e), moderate on 64 MiB (v7x).
    tm_pref = 512 if vmem >= 96 * 1024 * 1024 else 256
    tm = min(tm_pref, _round_up(max(TK, 8), 8))
    # Megacore balance: keep >= 2 token blocks when there is enough work.
    if TK >= 16 and (TK + tm - 1) // tm < 2:
        tm = _round_up((TK + 1) // 2, 8)

    # FFN chunk: whole F if small, else the largest fitting multiple of 128.
    if F <= 512:
        tf = F
    else:
        cand = [c for c in range(512, 127, -128) if F % c == 0]
        if not cand:
            cand = [c for c in range(512, 7, -8) if F % c == 0] or [F]
        tf = cand[-1]
        for c in cand:
            if _tile_vmem_bytes(tm, c, H, x_bytes, w_bytes) <= budget:
                tf = c
                break

    while tm > 8 and _tile_vmem_bytes(tm, tf, H, x_bytes, w_bytes) > budget:
        tm = max(8, _round_up(tm // 2, 8))
    return tm, tf


def _vmem_limit_bytes(tm, tf, H, x_bytes, w_bytes):
    vmem = _vmem_capacity()
    need = _tile_vmem_bytes(tm, tf, H, x_bytes, w_bytes)
    limit = max(32 << 20, int(need * 1.3) + (6 << 20))
    return min(limit, int(vmem * 0.85))


# ---------------------------------------------------------------------------
# Wrapper: router (plain JAX) + token-sorted grouped-GEMM expert mixture
# ---------------------------------------------------------------------------
def dbrx_ffn(x, router_w, w1, v1, w2, *, moe_top_k,
             moe_normalize_expert_weights=1.0, tile_m=None, tile_f=None):
    """x: (B, S, H); router_w: (E, H); w1/v1/w2: (E, F, H) (natural HF layout)."""
    bsz, q_len, hidden = x.shape
    T = bsz * q_len
    E, F, H = w1.shape
    assert H == hidden and v1.shape == w1.shape and w2.shape == w1.shape
    assert router_w.shape == (E, H)
    K = int(moe_top_k)

    x2d = x.reshape(T, H)

    # ---- router: logits + softmax(fp32) + top-k (tiny; left to XLA) --------
    logits = x2d @ router_w.T
    weights = jax.nn.softmax(logits.astype(jnp.float32), axis=-1)      # (T, E)
    top_w, top_e = lax.top_k(weights, K)
    if moe_normalize_expert_weights is not None:
        p = moe_normalize_expert_weights
        top_w = top_w / (jnp.sum(jnp.abs(top_w) ** p, axis=-1,
                                 keepdims=True) ** (1.0 / p))
    weights_out = weights.astype(x.dtype)
    top_w = top_w.astype(x.dtype)           # match torch cast to hidden dtype

    # ---- token-sorted grouped layout ---------------------------------------
    TK = T * K
    flat_e = top_e.reshape(TK).astype(jnp.int32)
    flat_t = jnp.repeat(jnp.arange(T, dtype=jnp.int32), K)
    flat_w = top_w.reshape(TK).astype(jnp.float32)

    order = jnp.argsort(flat_e)
    srt_e = flat_e[order]
    srt_t = flat_t[order]
    srt_w = flat_w[order]

    x_bytes = jnp.dtype(x.dtype).itemsize
    w_bytes = jnp.dtype(w1.dtype).itemsize
    tm, tf = _pick_tiles(TK, H, F, x_bytes, w_bytes)
    if tile_m is not None:
        tm = tile_m
    if tile_f is not None:
        tf = tile_f
    assert tm % 8 == 0 and F % tf == 0
    n_f = F // tf

    NB = (TK + tm - 1) // tm + E        # static upper bound on used token blocks
    NR = NB * tm

    counts = jnp.bincount(flat_e, length=E).astype(jnp.int32)           # (E,)
    gstart = jnp.concatenate([jnp.zeros((1,), jnp.int32),
                              jnp.cumsum(counts)[:-1].astype(jnp.int32)])
    blocks_per_e = (counts + tm - 1) // tm
    cum_blocks = jnp.cumsum(blocks_per_e).astype(jnp.int32)             # inclusive
    pstart = (jnp.concatenate([jnp.zeros((1,), jnp.int32),
                               cum_blocks[:-1]]) * tm).astype(jnp.int32)

    pos_in_group = jnp.arange(TK, dtype=jnp.int32) - gstart[srt_e]
    padded_pos = pstart[srt_e] + pos_in_group                           # (TK,)

    gather_idx = jnp.full((NR,), T, jnp.int32).at[padded_pos].set(srt_t)
    row_w = jnp.zeros((NR, 1), jnp.float32).at[padded_pos, 0].set(srt_w)

    block_expert = jnp.searchsorted(
        cum_blocks, jnp.arange(NB, dtype=jnp.int32), side='right')
    block_expert = jnp.minimum(block_expert, E - 1).astype(jnp.int32)
    n_used = cum_blocks[-1].reshape(1).astype(jnp.int32)

    x_pad = jnp.concatenate([x2d, jnp.zeros((1, H), x2d.dtype)], axis=0)
    x_sorted = x_pad[gather_idx]                                        # (NR, H)

    # ---- grouped-GEMM Pallas call -------------------------------------------
    y_sorted = pl.pallas_call(
        _moe_gmm_kernel,
        out_shape=jax.ShapeDtypeStruct((NR, H), x.dtype),
        grid_spec=pltpu.PrefetchScalarGridSpec(
            num_scalar_prefetch=2,                 # block->expert, #used blocks
            grid=(NB, n_f),
            in_specs=[
                pl.BlockSpec((tm, H), lambda b, f, be, nu: (b, 0)),           # x rows
                pl.BlockSpec((1, tf, H), lambda b, f, be, nu: (be[b], f, 0)), # w1
                pl.BlockSpec((1, tf, H), lambda b, f, be, nu: (be[b], f, 0)), # v1
                pl.BlockSpec((1, tf, H), lambda b, f, be, nu: (be[b], f, 0)), # w2
                pl.BlockSpec((tm, 1), lambda b, f, be, nu: (b, 0)),           # row wts
            ],
            out_specs=pl.BlockSpec((tm, H), lambda b, f, be, nu: (b, 0)),
            scratch_shapes=[pltpu.VMEM((tm, H), jnp.float32)],                # f32 acc
        ),
        compiler_params=pltpu.CompilerParams(
            dimension_semantics=("parallel", "arbitrary"),
            vmem_limit_bytes=_vmem_limit_bytes(tm, tf, H, x_bytes, w_bytes),
        ),
    )(block_expert, n_used, x_sorted, w1, v1, w2, row_w)

    # ---- un-sort + combine the top_k contributions per token ----------------
    contrib = y_sorted[padded_pos].astype(jnp.float32)                  # (TK, H)
    out2d = jnp.zeros((T, H), jnp.float32).at[srt_t].add(contrib)
    return out2d.astype(x.dtype).reshape(bsz, q_len, H), weights_out


# ---------------------------------------------------------------------------
# Pure-JAX reference (mirrors the PyTorch forward) for a sanity check
# ---------------------------------------------------------------------------
def dbrx_ffn_ref(x, router_w, w1, v1, w2, *, moe_top_k,
                 moe_normalize_expert_weights=1.0):
    bsz, q_len, hidden = x.shape
    x2d = x.reshape(-1, hidden)
    logits = x2d @ router_w.T
    weights = jax.nn.softmax(logits.astype(jnp.float32), axis=-1)
    top_w, top_e = lax.top_k(weights, moe_top_k)
    if moe_normalize_expert_weights is not None:
        p = moe_normalize_expert_weights
        top_w = top_w / (jnp.sum(jnp.abs(top_w) ** p, -1, keepdims=True) ** (1.0 / p))
    top_w = top_w.astype(x.dtype)
    E = w1.shape[0]
    scaled = jnp.einsum("tke,tk->te",
                        jax.nn.one_hot(top_e, E, dtype=jnp.float32),
                        top_w.astype(jnp.float32))
    out = jnp.zeros(x2d.shape, jnp.float32)
    for e in range(E):
        gate = x2d @ w1[e].T
        up = x2d @ v1[e].T
        inter = jax.nn.silu(gate) * up
        down = inter @ w2[e]
        out = out + scaled[:, e:e + 1] * down.astype(jnp.float32)
    return out.astype(x.dtype).reshape(bsz, q_len, hidden), weights.astype(x.dtype)


# ---------------------------------------------------------------------------
if __name__ == "__main__":
    def run_case(name, *, d_model, ffn_hidden, n_experts, top_k, bsz, q_len,
                 dtype=jnp.float32, w_scale=0.02, rtol=1e-4, atol=1e-5,
                 tile_m=None, tile_f=None, seed=0):
        key = jax.random.PRNGKey(seed)
        kx, kr, k1, k2, k3 = jax.random.split(key, 5)
        x = jax.random.normal(kx, (bsz, q_len, d_model), jnp.float32).astype(dtype)
        router_w = (0.02 * jax.random.normal(
            kr, (n_experts, d_model), jnp.float32)).astype(dtype)
        w1 = (w_scale * jax.random.normal(
            k1, (n_experts, ffn_hidden, d_model), jnp.float32)).astype(dtype)
        v1 = (w_scale * jax.random.normal(
            k2, (n_experts, ffn_hidden, d_model), jnp.float32)).astype(dtype)
        w2 = (w_scale * jax.random.normal(
            k3, (n_experts, ffn_hidden, d_model), jnp.float32)).astype(dtype)

        out, weights = dbrx_ffn(
            x, router_w, w1, v1, w2, moe_top_k=top_k,
            moe_normalize_expert_weights=1.0, tile_m=tile_m, tile_f=tile_f)
        jax.block_until_ready((out, weights))

        out_ref, weights_ref = dbrx_ffn_ref(
            x, router_w, w1, v1, w2, moe_top_k=top_k,
            moe_normalize_expert_weights=1.0)
        assert jnp.allclose(out.astype(jnp.float32), out_ref.astype(jnp.float32),
                            rtol=rtol, atol=atol), f"{name}: expert output mismatch"
        assert jnp.allclose(weights.astype(jnp.float32),
                            weights_ref.astype(jnp.float32),
                            rtol=rtol, atol=max(atol, 1e-6)), \
            f"{name}: router weights mismatch"

    # Small shapes, f32, single F chunk, tight tolerance.
    run_case("small_f32", d_model=32, ffn_hidden=64, n_experts=4, top_k=2,
             bsz=2, q_len=8)
    # Multiple F chunks, forced small tiles, odd token count (group padding,
    # padded blocks skipped via the prefetched used-block count).
    run_case("tiled_f32", d_model=32, ffn_hidden=640, n_experts=4, top_k=2,
             bsz=2, q_len=9, tile_m=8, tile_f=128)
    # bf16 activations + weights (the production DBRX path); loose tolerance.
    run_case("bf16", d_model=32, ffn_hidden=128, n_experts=8, top_k=2,
             bsz=2, q_len=16, dtype=jnp.bfloat16, w_scale=0.2,
             rtol=1e-1, atol=1e-1)

    print("KERNEL_OK")
</pallas_src>

<mosaic_0001>
module attributes {stable_mosaic.version = 11 : i64} {
  func.func @_moe_gmm_kernel(%arg0: i32, %arg1: i32, %arg2: memref<6xi32, #tpu.memory_space<smem>>, %arg3: memref<1xi32, #tpu.memory_space<smem>>, %arg4: memref<16x32xf32, #tpu.memory_space<vmem>>, %arg5: memref<1x64x32xf32, #tpu.memory_space<vmem>>, %arg6: memref<1x64x32xf32, #tpu.memory_space<vmem>>, %arg7: memref<1x64x32xf32, #tpu.memory_space<vmem>>, %arg8: memref<16x1xf32, #tpu.memory_space<vmem>>, %arg9: memref<16x32xf32, #tpu.memory_space<vmem>>, %arg10: memref<16x32xf32, #tpu.memory_space<vmem>>) attributes {dimension_semantics = [#tpu.dimension_semantics<parallel>, #tpu.dimension_semantics<arbitrary>], iteration_bounds = array<i64: 6, 1>, scalar_prefetch = 2 : i64, scratch_operands = 1 : i64, tpu.core_type = #tpu.core_type<tc>, window_params = [{transform_indices = @transform_0, window_bounds = array<i64: 16, 32>}, {transform_indices = @transform_1, window_bounds = array<i64: 1, 64, 32>}, {transform_indices = @transform_2, window_bounds = array<i64: 1, 64, 32>}, {transform_indices = @transform_3, window_bounds = array<i64: 1, 64, 32>}, {transform_indices = @transform_4, window_bounds = array<i64: 16, 1>}, {transform_indices = @transform_5, window_bounds = array<i64: 16, 32>}]} {
    %c0_i32 = arith.constant 0 : i32
    %0 = arith.cmpi eq, %arg1, %c0_i32 : i32
    %1 = arith.extui %0 : i1 to i32
    %c0_i32_0 = arith.constant 0 : i32
    %2 = arith.cmpi ne, %1, %c0_i32_0 : i32
    scf.if %2 {
      %cst = arith.constant 0.000000e+00 : f32
      %10 = vector.broadcast %cst : f32 to vector<16x32xf32>
      %c0_4 = arith.constant 0 : index
      %c0_5 = arith.constant 0 : index
      %11 = vector.load %arg10[%c0_4, %c0_5] : memref<16x32xf32, #tpu.memory_space<vmem>>, vector<16x32xf32>
      tpu.vector_store %arg10[%c0_4, %c0_5], %10 {strides = array<i32>} : memref<16x32xf32, #tpu.memory_space<vmem>>, vector<16x32xf32>,
    } else {
    }
    %c0 = arith.constant 0 : index
    %3 = memref.load %arg3[%c0] : memref<1xi32, #tpu.memory_space<smem>>
    %4 = arith.cmpi slt, %arg0, %3 : i32
    %5 = arith.extui %4 : i1 to i32
    %c0_i32_1 = arith.constant 0 : i32
    %6 = arith.cmpi ne, %5, %c0_i32_1 : i32
    scf.if %6 {
      %c0_4 = arith.constant 0 : index
      %c0_5 = arith.constant 0 : index
      %10 = vector.load %arg4[%c0_4, %c0_5] : memref<16x32xf32, #tpu.memory_space<vmem>>, vector<16x32xf32>
      %c0_6 = arith.constant 0 : index
      %c0_7 = arith.constant 0 : index
      %c0_8 = arith.constant 0 : index
      %11 = vector.load %arg5[%c0_6, %c0_7, %c0_8] : memref<1x64x32xf32, #tpu.memory_space<vmem>>, vector<1x64x32xf32>
      %12 = vector.shape_cast %11 : vector<1x64x32xf32> to vector<64x32xf32>
      %c0_9 = arith.constant 0 : index
      %c0_10 = arith.constant 0 : index
      %c0_11 = arith.constant 0 : index
      %13 = vector.load %arg6[%c0_9, %c0_10, %c0_11] : memref<1x64x32xf32, #tpu.memory_space<vmem>>, vector<1x64x32xf32>
      %14 = vector.shape_cast %13 : vector<1x64x32xf32> to vector<64x32xf32>
      %c0_12 = arith.constant 0 : index
      %c0_13 = arith.constant 0 : index
      %c0_14 = arith.constant 0 : index
      %15 = vector.load %arg7[%c0_12, %c0_13, %c0_14] : memref<1x64x32xf32, #tpu.memory_space<vmem>>, vector<1x64x32xf32>
      %16 = vector.shape_cast %15 : vector<1x64x32xf32> to vector<64x32xf32>
      %cst = arith.constant dense<0.000000e+00> : vector<16x64xf32>
      %17 = tpu.matmul %10, %12, %cst {dimension_numbers = #tpu.dot_dimension_numbers<[1], [1], [0], [0], [0, 0, 1, 0], [], []>} : vector<16x32xf32>, vector<64x32xf32>, vector<16x64xf32> -> vector<16x64xf32>
      %cst_15 = arith.constant dense<0.000000e+00> : vector<16x64xf32>
      %18 = tpu.matmul %10, %14, %cst_15 {dimension_numbers = #tpu.dot_dimension_numbers<[1], [1], [0], [0], [0, 0, 1, 0], [], []>} : vector<16x32xf32>, vector<64x32xf32>, vector<16x64xf32> -> vector<16x64xf32>
      %19 = arith.negf %17 : vector<16x64xf32>
      %20 = math.exp %19 : vector<16x64xf32>
      %cst_16 = arith.constant 1.000000e+00 : f32
      %21 = vector.broadcast %cst_16 : f32 to vector<16x64xf32>
      %22 = arith.addf %21, %20 : vector<16x64xf32>
      %23 = arith.divf %21, %22 : vector<16x64xf32>
      %24 = arith.mulf %17, %23 : vector<16x64xf32>
      %25 = arith.mulf %24, %18 : vector<16x64xf32>
      %c0_17 = arith.constant 0 : index
      %c0_18 = arith.constant 0 : index
      %26 = vector.load %arg8[%c0_17, %c0_18] : memref<16x1xf32, #tpu.memory_space<vmem>>, vector<16x1xf32>
      %27 = vector.broadcast %26 : vector<16x1xf32> to vector<16x64xf32>
      %28 = arith.mulf %25, %27 : vector<16x64xf32>
      %c0_19 = arith.constant 0 : index
      %c0_20 = arith.constant 0 : index
      %29 = vector.load %arg10[%c0_19, %c0_20] : memref<16x32xf32, #tpu.memory_space<vmem>>, vector<16x32xf32>
      %cst_21 = arith.constant dense<0.000000e+00> : vector<16x32xf32>
      %30 = tpu.matmul %28, %16, %cst_21 {dimension_numbers = #tpu.dot_dimension_numbers<[1], [0], [0], [1], [0, 0, 1, 1], [], []>} : vector<16x64xf32>, vector<64x32xf32>, vector<16x32xf32> -> vector<16x32xf32>
      %31 = arith.addf %29, %30 : vector<16x32xf32>
      %c0_22 = arith.constant 0 : index
      %c0_23 = arith.constant 0 : index
      %32 = vector.load %arg10[%c0_22, %c0_23] : memref<16x32xf32, #tpu.memory_space<vmem>>, vector<16x32xf32>
      tpu.vector_store %arg10[%c0_22, %c0_23], %31 {strides = array<i32>} : memref<16x32xf32, #tpu.memory_space<vmem>>, vector<16x32xf32>,
    } else {
    }
    %c0_i32_2 = arith.constant 0 : i32
    %7 = arith.cmpi eq, %arg1, %c0_i32_2 : i32
    %8 = arith.extui %7 : i1 to i32
    %c0_i32_3 = arith.constant 0 : i32
    %9 = arith.cmpi ne, %8, %c0_i32_3 : i32
    scf.if %9 {
      %c0_4 = arith.constant 0 : index
      %c0_5 = arith.constant 0 : index
      %10 = vector.load %arg10[%c0_4, %c0_5] : memref<16x32xf32, #tpu.memory_space<vmem>>, vector<16x32xf32>
      %c0_6 = arith.constant 0 : index
      %c0_7 = arith.constant 0 : index
      %11 = vector.load %arg9[%c0_6, %c0_7] : memref<16x32xf32, #tpu.memory_space<vmem>>, vector<16x32xf32>
      tpu.vector_store %arg9[%c0_6, %c0_7], %10 {strides = array<i32>} : memref<16x32xf32, #tpu.memory_space<vmem>>, vector<16x32xf32>,
    } else {
    }
    return
  }
  func.func @transform_0(%arg0: i32, %arg1: i32, %arg2: memref<6xi32, #tpu.memory_space<smem>>, %arg3: memref<1xi32, #tpu.memory_space<smem>>) -> (i32, i32) {
    %c0_i32 = arith.constant 0 : i32
    %c0_i32_0 = arith.constant 0 : i32
    return %arg0, %c0_i32 : i32, i32
  }
  func.func @transform_1(%arg0: i32, %arg1: i32, %arg2: memref<6xi32, #tpu.memory_space<smem>>, %arg3: memref<1xi32, #tpu.memory_space<smem>>) -> (i32, i32, i32) {
    %0 = arith.index_cast %arg0 : i32 to index
    %1 = memref.load %arg2[%0] : memref<6xi32, #tpu.memory_space<smem>>
    %c0_i32 = arith.constant 0 : i32
    %c0_i32_0 = arith.constant 0 : i32
    return %1, %arg1, %c0_i32 : i32, i32, i32
  }
  func.func @transform_2(%arg0: i32, %arg1: i32, %arg2: memref<6xi32, #tpu.memory_space<smem>>, %arg3: memref<1xi32, #tpu.memory_space<smem>>) -> (i32, i32, i32) {
    %0 = arith.index_cast %arg0 : i32 to index
    %1 = memref.load %arg2[%0] : memref<6xi32, #tpu.memory_space<smem>>
    %c0_i32 = arith.constant 0 : i32
    %c0_i32_0 = arith.constant 0 : i32
    return %1, %arg1, %c0_i32 : i32, i32, i32
  }
  func.func @transform_3(%arg0: i32, %arg1: i32, %arg2: memref<6xi32, #tpu.memory_space<smem>>, %arg3: memref<1xi32, #tpu.memory_space<smem>>) -> (i32, i32, i32) {
    %0 = arith.index_cast %arg0 : i32 to index
    %1 = memref.load %arg2[%0] : memref<6xi32, #tpu.memory_space<smem>>
    %c0_i32 = arith.constant 0 : i32
    %c0_i32_0 = arith.constant 0 : i32
    return %1, %arg1, %c0_i32 : i32, i32, i32
  }
  func.func @transform_4(%arg0: i32, %arg1: i32, %arg2: memref<6xi32, #tpu.memory_space<smem>>, %arg3: memref<1xi32, #tpu.memory_space<smem>>) -> (i32, i32) {
    %c0_i32 = arith.constant 0 : i32
    %c0_i32_0 = arith.constant 0 : i32
    return %arg0, %c0_i32 : i32, i32
  }
  func.func @transform_5(%arg0: i32, %arg1: i32, %arg2: memref<6xi32, #tpu.memory_space<smem>>, %arg3: memref<1xi32, #tpu.memory_space<smem>>) -> (i32, i32) {
    %c0_i32 = arith.constant 0 : i32
    %c0_i32_0 = arith.constant 0 : i32
    return %arg0, %c0_i32 : i32, i32
  }
}

</mosaic_0001>

<llo_original>
// kernel: tpu_custom_call.1
$region0: #{tpu_custom_call.1}
  #allocation0 [shape = 'u32[]', space=smem, size = 0x4, offset = 0x4, fixed_abs, tag = 'smem constant byte address 0x4 - core index']
  #allocation1 [shape = 'u32[144,128]{1,0:T(1,128)}', space=vmem, size = 0x12000, scoped, tag = 'internal scratch']
  #allocation2 [shape = 'f32[16,32]{1,0:T(8,128)}', space=vmem, size = 0x2000, scoped, tag = 'scratch operand']
  #allocation3 [shape = 's32[1]{0}', space=sflag, size = 0x4, scoped, tag = 'scoped memory for tpu_custom_call.1']
  #allocation4 [shape = 'u8[512]{0}', space=smem, size = 0x200, scoped, tag = 'prefetched SMEM operand 0']
  #allocation5 [shape = 's32[1]{0:T(128)S(6)}', space=smem, size = 0x200, scoped, tag = 'prefetched SMEM operand 1']
  %s0 = inlined_call_operand.vmem [shape: s32[6], index: 0, kind: input, shape index: {}]
  %s1 = inlined_call_operand.<no memory space> [shape: s32[1], index: 1, kind: input, shape index: {}]
  %s2 = inlined_call_operand.vmem [shape: f32[96,32], index: 2, kind: input, shape index: {}]
  %s3 = inlined_call_operand.vmem [shape: f32[4,64,32], index: 3, kind: input, shape index: {}]
  %s4 = inlined_call_operand.vmem [shape: f32[4,64,32], index: 4, kind: input, shape index: {}]
  %s5 = inlined_call_operand.vmem [shape: f32[4,64,32], index: 5, kind: input, shape index: {}]
  %s6 = inlined_call_operand.vmem [shape: f32[96,1], index: 6, kind: input, shape index: {}]
  %s7 = inlined_call_operand.vmem [shape: f32[96,32], index: 7, kind: output, shape index: {}]
  %s8 = sld [smem:[#allocation0]]
  $region65: #{tpu_custom_call.1} parent=0
    _
  %s10 = ssub.s32 1, %s8
  %s11 = scalar_select 0, %s10, %s8
  %s12 = sshll.u32 %s0, 4
  %s13 = int_to_ptr.vmem [resolvable:$true] %s12
  %15 = dma.vmem_to_smem %s13, 16, [#allocation4], [#allocation3]
  %16 = sst [smem:[#allocation5]] %s1
  %17 = dma.done [#allocation3], 16
  %18 = sfence
  loop: start=0, step=1, limit=8
  $region2: #{tpu_custom_call.1} parent=0 // loop_pre_header
    _
  $region3: #{tpu_custom_call.1} parent=0 // loop_header
    %s20 = sphi 0, %s24
    %p21 = scmp.ge.s32.totalorder %s20, 8
    %s27 = sphi 0, %s39
    %s28 = sphi 0, %s35
    %s29 = sphi 0, %s27
    %s30 = sphi 0, %s28
    %s31 = sphi 0, %s29
    %s32 = sphi 0, %s30
    %s42 = sphi 0, %s44
    %s45 = sphi 0, %s42
    %s46 = sphi 0, %s45
    %s62 = sphi 0, %s46
    %s72 = sphi 0, %s74
    %s75 = sphi 0, %s72
    %s76 = sphi 0, %s75
    %s92 = sphi 0, %s76
    %s102 = sphi 0, %s104
    %s105 = sphi 0, %s102
    %s106 = sphi 0, %s105
    %s122 = sphi 0, %s106
    %s132 = sphi 0, %s134
    %s135 = sphi 0, %s132
    %s136 = sphi 0, %s135
    %s152 = sphi 0, %s136
    %s158 = sphi 0, %s160
    %s161 = sphi 0, %s158
    %s162 = sphi 0, %s161
    %s178 = sphi 0, %s162
    %s184 = sphi 0, %s186
    %s187 = sphi 0, %s184
    %s188 = sphi 0, %s187
    %s204 = sphi 0, %s188
  $region4: #{tpu_custom_call.1} parent=0 // loop_header_branch
    %23 = sbr.rel (%p21) target = $region8
  $region5: #{tpu_custom_call.1} parent=0 // loop_body
    %s25 = ssub.s32 %s20, 1
    %s26 = ssub.s32 %s20, 2
    %s33 = sadd.s32 1, %s28
    %p34 = scmp.ge.s32.totalorder %s33, 1
    %s35 = scalar_select %p34, 0, %s33
    %s36 = sadd.s32 1, %s27
    %s37 = scalar_select %p34, %s36, %s27
    %p38 = scmp.ge.s32.totalorder %s37, 6
    %s39 = scalar_select %p38, 0, %s37
    %s40 = ssub.s32 %s27, %s39
    %p41 = scmp.eq.s32.totalorder %s40, 0
    %s43 = sadd.s32 %s42, 1
    %s44 = scalar_select %p41, %s42, %s43
    %p47 = pneg %p41
    %p48 = scmp.eq.s32.totalorder %s20, 5
    %p49 = por %p47, %p48
    %p50 = scmp.ne.s32.totalorder %s42, %s45
    %p51 = scmp.eq.s32.totalorder %s20, 0
    %p52 = por %p50, %p51
    %p53 = scmp.ne.s32.totalorder %s42, %s45
    %p54 = scmp.eq.s32.totalorder %s25, 5
    %p55 = por %p53, %p54
    %p56 = scmp.ne.s32.totalorder %s45, %s46
    %p57 = scmp.eq.s32.totalorder %s25, 0
    %p58 = por %p56, %p57
    %p59 = scmp.ne.s32.totalorder %s45, %s46
    %p60 = scmp.eq.s32.totalorder %s26, 5
    %p61 = por %p59, %p60
    %p63 = scmp.ne.s32.totalorder %s46, %s62
    %p64 = scmp.eq.s32.totalorder %s26, 0
    %p65 = por %p63, %p64
    %s66 = sld [smem:[#allocation4 + %s27]]
    %s67 = sld [smem:[#allocation4 + %s39]]
    %s68 = ssub.s32 %s66, %s67
    %s69 = ssub.s32 %s28, %s35
    %s70 = sor.u32 %s68, %s69
    %p71 = scmp.eq.s32.totalorder %s70, 0
    %s73 = sadd.s32 %s72, 1
    %s74 = scalar_select %p71, %s72, %s73
    %p77 = pneg %p71
    %p78 = scmp.eq.s32.totalorder %s20, 5
    %p79 = por %p77, %p78
    %p80 = scmp.ne.s32.totalorder %s72, %s75
    %p81 = scmp.eq.s32.totalorder %s20, 0
    %p82 = por %p80, %p81
    %p83 = scmp.ne.s32.totalorder %s72, %s75
    %p84 = scmp.eq.s32.totalorder %s25, 5
    %p85 = por %p83, %p84
    %p86 = scmp.ne.s32.totalorder %s75, %s76
    %p87 = scmp.eq.s32.totalorder %s25, 0
    %p88 = por %p86, %p87
    %p89 = scmp.ne.s32.totalorder %s75, %s76
    %p90 = scmp.eq.s32.totalorder %s26, 5
    %p91 = por %p89, %p90
    %p93 = scmp.ne.s32.totalorder %s76, %s92
    %p94 = scmp.eq.s32.totalorder %s26, 0
    %p95 = por %p93, %p94
    %s96 = sld [smem:[#allocation4 + %s27]]
    %s97 = sld [smem:[#allocation4 + %s39]]
    %s98 = ssub.s32 %s96, %s97
    %s99 = ssub.s32 %s28, %s35
    %s100 = sor.u32 %s98, %s99
    %p101 = scmp.eq.s32.totalorder %s100, 0
    %s103 = sadd.s32 %s102, 1
    %s104 = scalar_select %p101, %s102, %s103
    %p107 = pneg %p101
    %p108 = scmp.eq.s32.totalorder %s20, 5
    %p109 = por %p107, %p108
    %p110 = scmp.ne.s32.totalorder %s102, %s105
    %p111 = scmp.eq.s32.totalorder %s20, 0
    %p112 = por %p110, %p111
    %p113 = scmp.ne.s32.totalorder %s102, %s105
    %p114 = scmp.eq.s32.totalorder %s25, 5
    %p115 = por %p113, %p114
    %p116 = scmp.ne.s32.totalorder %s105, %s106
    %p117 = scmp.eq.s32.totalorder %s25, 0
    %p118 = por %p116, %p117
    %p119 = scmp.ne.s32.totalorder %s105, %s106
    %p120 = scmp.eq.s32.totalorder %s26, 5
    %p121 = por %p119, %p120
    %p123 = scmp.ne.s32.totalorder %s106, %s122
    %p124 = scmp.eq.s32.totalorder %s26, 0
    %p125 = por %p123, %p124
    %s126 = sld [smem:[#allocation4 + %s27]]
    %s127 = sld [smem:[#allocation4 + %s39]]
    %s128 = ssub.s32 %s126, %s127
    %s129 = ssub.s32 %s28, %s35
    %s130 = sor.u32 %s128, %s129
    %p131 = scmp.eq.s32.totalorder %s130, 0
    %s133 = sadd.s32 %s132, 1
    %s134 = scalar_select %p131, %s132, %s133
    %p137 = pneg %p131
    %p138 = scmp.eq.s32.totalorder %s20, 5
    %p139 = por %p137, %p138
    %p140 = scmp.ne.s32.totalorder %s132, %s135
    %p141 = scmp.eq.s32.totalorder %s20, 0
    %p142 = por %p140, %p141
    %p143 = scmp.ne.s32.totalorder %s132, %s135
    %p144 = scmp.eq.s32.totalorder %s25, 5
    %p145 = por %p143, %p144
    %p146 = scmp.ne.s32.totalorder %s135, %s136
    %p147 = scmp.eq.s32.totalorder %s25, 0
    %p148 = por %p146, %p147
    %p149 = scmp.ne.s32.totalorder %s135, %s136
    %p150 = scmp.eq.s32.totalorder %s26, 5
    %p151 = por %p149, %p150
    %p153 = scmp.ne.s32.totalorder %s136, %s152
    %p154 = scmp.eq.s32.totalorder %s26, 0
    %p155 = por %p153, %p154
    %s156 = ssub.s32 %s27, %s39
    %p157 = scmp.eq.s32.totalorder %s156, 0
    %s159 = sadd.s32 %s158, 1
    %s160 = scalar_select %p157, %s158, %s159
    %p163 = pneg %p157
    %p164 = scmp.eq.s32.totalorder %s20, 5
    %p165 = por %p163, %p164
    %p166 = scmp.ne.s32.totalorder %s158, %s161
    %p167 = scmp.eq.s32.totalorder %s20, 0
    %p168 = por %p166, %p167
    %p169 = scmp.ne.s32.totalorder %s158, %s161
    %p170 = scmp.eq.s32.totalorder %s25, 5
    %p171 = por %p169, %p170
    %p172 = scmp.ne.s32.totalorder %s161, %s162
    %p173 = scmp.eq.s32.totalorder %s25, 0
    %p174 = por %p172, %p173
    %p175 = scmp.ne.s32.totalorder %s161, %s162
    %p176 = scmp.eq.s32.totalorder %s26, 5
    %p177 = por %p175, %p176
    %p179 = scmp.ne.s32.totalorder %s162, %s178
    %p180 = scmp.eq.s32.totalorder %s26, 0
    %p181 = por %p179, %p180
    %s182 = ssub.s32 %s27, %s39
    %p183 = scmp.eq.s32.totalorder %s182, 0
    %s185 = sadd.s32 %s184, 1
    %s186 = scalar_select %p183, %s184, %s185
    %p189 = pneg %p183
    %p190 = scmp.eq.s32.totalorder %s20, 5
    %p191 = por %p189, %p190
    %p192 = scmp.ne.s32.totalorder %s184, %s187
    %p193 = scmp.eq.s32.totalorder %s20, 0
    %p194 = por %p192, %p193
    %p195 = scmp.ne.s32.totalorder %s184, %s187
    %p196 = scmp.eq.s32.totalorder %s25, 5
    %p197 = por %p195, %p196
    %p198 = scmp.ne.s32.totalorder %s187, %s188
    %p199 = scmp.eq.s32.totalorder %s25, 0
    %p200 = por %p198, %p199
    %p201 = scmp.ne.s32.totalorder %s187, %s188
    %p202 = scmp.eq.s32.totalorder %s26, 5
    %p203 = por %p201, %p202
    %p205 = scmp.ne.s32.totalorder %s188, %s204
    %p206 = scmp.eq.s32.totalorder %s26, 0
    %p207 = por %p205, %p206
    %p208 = scmp.le.s32.totalorder 1, %s20
    %p209 = scmp.lt.s32.totalorder %s20, 7
    %p210 = pnand %p208, %p209
    %p211 = pneg %p210
    // Predicated region
    $region9: #{tpu_custom_call.1} parent=5 // pred_check
      _
    $region10: #{tpu_custom_call.1} parent=5 // pred_check_branch
      %213 = sbr.rel (%p210) target = $region12
    $region11: #{tpu_custom_call.1} parent=5 // pred_region
      %s214 = ssub.s32 %s20, 1
    $region12: #{tpu_custom_call.1} parent=5 // pred_fallthru
      _
    %p215 = scmp.lt.s32.totalorder %s20, 6
    // Predicated region
    $region13: #{tpu_custom_call.1} parent=5 // pred_check
      %p216 = pneg %p215
    $region14: #{tpu_custom_call.1} parent=5 // pred_check_branch
      %218 = sbr.rel (%p216) target = $region16
    $region15: #{tpu_custom_call.1} parent=5 // pred_region
      // Predicated region
      $region17: #{tpu_custom_call.1} parent=15 // pred_check
        %p219 = pneg %p52
      $region18: #{tpu_custom_call.1} parent=15 // pred_check_branch
        %221 = sbr.rel (%p219) target = $region20
      $region19: #{tpu_custom_call.1} parent=15 // pred_region
        %s222 = smul.u32 2, %s27
        %p223 = scmp.lt.s32.totalorder %s222, 11
        %s224 = scalar_select %p223, %s222, 11
        %s225 = smul.addr %s224, 8
        %s226 = scalar_lea.vmem %s2, %s225
        %s227 = smul.u32 2, %s27
      $region20: #{tpu_custom_call.1} parent=15 // pred_fallthru
        _
      // Predicated region
      $region21: #{tpu_custom_call.1} parent=15 // pred_check
        %p228 = pneg %p82
      $region22: #{tpu_custom_call.1} parent=15 // pred_check_branch
        %230 = sbr.rel (%p228) target = $region24
      $region23: #{tpu_custom_call.1} parent=15 // pred_region
        %s231 = sld [smem:[#allocation4 + %s27]]
        %s232 = smul.u32 8, %s28
        %p233 = scmp.lt.s32.totalorder %s231, 3
        %s234 = scalar_select %p233, %s231, 3
        %p235 = scmp.lt.s32.totalorder %s232, 7
        %s236 = scalar_select %p235, %s232, 7
        %s237 = smul.addr %s234, 8
        %s238 = sadd.s32 %s236, %s237
        %s239 = smul.addr %s238, 8
        %s240 = scalar_lea.vmem %s3, %s239
        %s241 = sld [smem:[#allocation4 + %s27]]
        %s242 = smul.u32 8, %s28
      $region24: #{tpu_custom_call.1} parent=15 // pred_fallthru
        _
      // Predicated region
      $region25: #{tpu_custom_call.1} parent=15 // pred_check
        %p243 = pneg %p112
      $region26: #{tpu_custom_call.1} parent=15 // pred_check_branch
        %245 = sbr.rel (%p243) target = $region28
      $region27: #{tpu_custom_call.1} parent=15 // pred_region
        %s246 = sld [smem:[#allocation4 + %s27]]
        %s247 = smul.u32 8, %s28
        %p248 = scmp.lt.s32.totalorder %s246, 3
        %s249 = scalar_select %p248, %s246, 3
        %p250 = scmp.lt.s32.totalorder %s247, 7
        %s251 = scalar_select %p250, %s247, 7
        %s252 = smul.addr %s249, 8
        %s253 = sadd.s32 %s251, %s252
        %s254 = smul.addr %s253, 8
        %s255 = scalar_lea.vmem %s4, %s254
        %s256 = sld [smem:[#allocation4 + %s27]]
        %s257 = smul.u32 8, %s28
      $region28: #{tpu_custom_call.1} parent=15 // pred_fallthru
        _
      // Predicated region
      $region29: #{tpu_custom_call.1} parent=15 // pred_check
        %p258 = pneg %p142
      $region30: #{tpu_custom_call.1} parent=15 // pred_check_branch
        %260 = sbr.rel (%p258) target = $region32
      $region31: #{tpu_custom_call.1} parent=15 // pred_region
        %s261 = sld [smem:[#allocation4 + %s27]]
        %s262 = smul.u32 8, %s28
        %p263 = scmp.lt.s32.totalorder %s261, 3
        %s264 = scalar_select %p263, %s261, 3
        %p265 = scmp.lt.s32.totalorder %s262, 7
        %s266 = scalar_select %p265, %s262, 7
        %s267 = smul.addr %s264, 8
        %s268 = sadd.s32 %s266, %s267
        %s269 = smul.addr %s268, 8
        %s270 = scalar_lea.vmem %s5, %s269
        %s271 = sld [smem:[#allocation4 + %s27]]
        %s272 = smul.u32 8, %s28
      $region32: #{tpu_custom_call.1} parent=15 // pred_fallthru
        _
      // Predicated region
      $region33: #{tpu_custom_call.1} parent=15 // pred_check
        %p273 = pneg %p168
      $region34: #{tpu_custom_call.1} parent=15 // pred_check_branch
        %275 = sbr.rel (%p273) target = $region36
      $region35: #{tpu_custom_call.1} parent=15 // pred_region
        %s276 = smul.u32 2, %s27
        %p277 = scmp.lt.s32.totalorder %s276, 11
        %s278 = scalar_select %p277, %s276, 11
        %s279 = smul.addr %s278, 8
        %s280 = scalar_lea.vmem %s6, %s279
        %s281 = smul.u32 2, %s27
      $region36: #{tpu_custom_call.1} parent=15 // pred_fallthru
        _
    $region16: #{tpu_custom_call.1} parent=5 // pred_fallthru
      _
    %p282 = scmp.le.s32.totalorder 1, %s20
    %p283 = scmp.lt.s32.totalorder %s20, 7
    %p284 = pnand %p282, %p283
    %p285 = pneg %p284
    // Predicated region
    $region37: #{tpu_custom_call.1} parent=5 // pred_check
      _
    $region38: #{tpu_custom_call.1} parent=5 // pred_check_branch
      %287 = sbr.rel (%p284) target = $region40
    $region39: #{tpu_custom_call.1} parent=5 // pred_region
      %s288 = ssub.s32 %s20, 1
      %s289 = smul.u32 2, %s29
      %p290 = scmp.lt.s32.totalorder %s289, 11
      %s291 = scalar_select %p290, %s289, 11
      %s292 = smul.addr %s291, 8
      %s293 = scalar_lea.vmem %s2, %s292
      %p294 = pneg %p58
      %p295 = pneg %p55
      %s296 = sld [smem:[#allocation4 + %s29]]
      %s297 = smul.u32 8, %s30
      %p298 = scmp.lt.s32.totalorder %s296, 3
      %s299 = scalar_select %p298, %s296, 3
      %p300 = scmp.lt.s32.totalorder %s297, 7
      %s301 = scalar_select %p300, %s297, 7
      %s302 = smul.addr %s299, 8
      %s303 = sadd.s32 %s301, %s302
      %s304 = smul.addr %s303, 8
      %s305 = scalar_lea.vmem %s3, %s304
      %p306 = pneg %p88
      %p307 = pneg %p85
      %s308 = sld [smem:[#allocation4 + %s29]]
      %s309 = smul.u32 8, %s30
      %p310 = scmp.lt.s32.totalorder %s308, 3
      %s311 = scalar_select %p310, %s308, 3
      %p312 = scmp.lt.s32.totalorder %s309, 7
      %s313 = scalar_select %p312, %s309, 7
      %s314 = smul.addr %s311, 8
      %s315 = sadd.s32 %s313, %s314
      %s316 = smul.addr %s315, 8
      %s317 = scalar_lea.vmem %s4, %s316
      %p318 = pneg %p118
      %p319 = pneg %p115
      %s320 = sld [smem:[#allocation4 + %s29]]
      %s321 = smul.u32 8, %s30
      %p322 = scmp.lt.s32.totalorder %s320, 3
      %s323 = scalar_select %p322, %s320, 3
      %p324 = scmp.lt.s32.totalorder %s321, 7
      %s325 = scalar_select %p324, %s321, 7
      %s326 = smul.addr %s323, 8
      %s327 = sadd.s32 %s325, %s326
      %s328 = smul.addr %s327, 8
      %s329 = scalar_lea.vmem %s5, %s328
      %p330 = pneg %p148
      %p331 = pneg %p145
      %s332 = smul.u32 2, %s29
      %p333 = scmp.lt.s32.totalorder %s332, 11
      %s334 = scalar_select %p333, %s332, 11
      %s335 = smul.addr %s334, 8
      %s336 = scalar_lea.vmem %s6, %s335
      %p337 = pneg %p174
      %p338 = pneg %p171
      %p339 = pneg %p200
      %p340 = pneg %p197
      %s341 = smul.u32 2, %s29
      %p342 = scmp.lt.s32.totalorder %s341, 11
      %s343 = scalar_select %p342, %s341, 11
      %s344 = smul.addr %s343, 8
      %s345 = scalar_lea.vmem %s7, %s344
      %s346 = smul.u32 2, %s29
      %p347 = scmp.lt.s32.totalorder %s346, 11
      %s348 = scalar_select %p347, %s346, 11
      %s349 = smul.addr %s348, 8
      %s350 = scalar_lea.vmem %s2, %s349
      %s351 = smul.u32 2, %s29
      %s352 = sld [smem:[#allocation4 + %s29]]
      %s353 = smul.u32 8, %s30
      %p354 = scmp.lt.s32.totalorder %s352, 3
      %s355 = scalar_select %p354, %s352, 3
      %p356 = scmp.lt.s32.totalorder %s353, 7
      %s357 = scalar_select %p356, %s353, 7
      %s358 = smul.addr %s355, 8
      %s359 = sadd.s32 %s357, %s358
      %s360 = smul.addr %s359, 8
      %s361 = scalar_lea.vmem %s3, %s360
      %s362 = sld [smem:[#allocation4 + %s29]]
      %s363 = smul.u32 8, %s30
      %s364 = sld [smem:[#allocation4 + %s29]]
      %s365 = smul.u32 8, %s30
      %p366 = scmp.lt.s32.totalorder %s364, 3
      %s367 = scalar_select %p366, %s364, 3
      %p368 = scmp.lt.s32.totalorder %s365, 7
      %s369 = scalar_select %p368, %s365, 7
      %s370 = smul.addr %s367, 8
      %s371 = sadd.s32 %s369, %s370
      %s372 = smul.addr %s371, 8
      %s373 = scalar_lea.vmem %s4, %s372
      %s374 = sld [smem:[#allocation4 + %s29]]
      %s375 = smul.u32 8, %s30
      %s376 = sld [smem:[#allocation4 + %s29]]
      %s377 = smul.u32 8, %s30
      %p378 = scmp.lt.s32.totalorder %s376, 3
      %s379 = scalar_select %p378, %s376, 3
      %p380 = scmp.lt.s32.totalorder %s377, 7
      %s381 = scalar_select %p380, %s377, 7
      %s382 = smul.addr %s379, 8
      %s383 = sadd.s32 %s381, %s382
      %s384 = smul.addr %s383, 8
      %s385 = scalar_lea.vmem %s5, %s384
      %s386 = sld [smem:[#allocation4 + %s29]]
      %s387 = smul.u32 8, %s30
      %s388 = smul.u32 2, %s29
      %p389 = scmp.lt.s32.totalorder %s388, 11
      %s390 = scalar_select %p389, %s388, 11
      %s391 = smul.addr %s390, 8
      %s392 = scalar_lea.vmem %s6, %s391
      %s393 = smul.u32 2, %s29
      %s394 = smul.u32 2, %s29
      %p395 = scmp.lt.s32.totalorder %s394, 11
      %s396 = scalar_select %p395, %s394, 11
      %s397 = smul.addr %s396, 8
      %s398 = scalar_lea.vmem %s7, %s397
      %s399 = smul.u32 2, %s29
      %p400 = scmp.eq.s32.totalorder %s30, 0
      // Predicated region
      $region41: #{tpu_custom_call.1} parent=39 // pred_check
        %p401 = pneg %p400
      $region42: #{tpu_custom_call.1} parent=39 // pred_check_branch
        %403 = sbr.rel (%p401) target = $region44
      $region43: #{tpu_custom_call.1} parent=39 // pred_region
        %vm404 = vcmask 261120
        %405 = vst.msk [vmem:[#allocation2] sm:$0xff] %vm404, 0.0
        %406 = vst.msk [vmem:[#allocation2 + $0x8] sm:$0xff] %vm404, 0.0
      $region44: #{tpu_custom_call.1} parent=39 // pred_fallthru
        _
      %s407 = sld [smem:[#allocation5]]
      %p408 = scmp.lt.s32.totalorder %s29, %s407
      // Predicated region
      $region45: #{tpu_custom_call.1} parent=39 // pred_check
        %p409 = pneg %p408
      $region46: #{tpu_custom_call.1} parent=39 // pred_check_branch
        %411 = sbr.rel (%p409) target = $region48
      $region47: #{tpu_custom_call.1} parent=39 // pred_region
        %v412 = vld [vmem:[%s350] sm:$0xff]
        %v413 = vld [vmem:[%s350 + $0x8] sm:$0xff]
        %v414 = vld [vmem:[%s361] sm:$0xff]
        %v415 = vld [vmem:[%s361 + $0x8] sm:$0xff]
        %v416 = vld [vmem:[%s361 + $0x10] sm:$0xff]
        %v417 = vld [vmem:[%s361 + $0x18] sm:$0xff]
        %v418 = vld [vmem:[%s361 + $0x20] sm:$0xff]
        %v419 = vld [vmem:[%s361 + $0x28] sm:$0xff]
        %v420 = vld [vmem:[%s361 + $0x30] sm:$0xff]
        %v421 = vld [vmem:[%s361 + $0x38] sm:$0xff]
        %v422 = vld [vmem:[%s373] sm:$0xff]
        %v423 = vld [vmem:[%s373 + $0x8] sm:$0xff]
        %v424 = vld [vmem:[%s373 + $0x10] sm:$0xff]
        %v425 = vld [vmem:[%s373 + $0x18] sm:$0xff]
        %v426 = vld [vmem:[%s373 + $0x20] sm:$0xff]
        %v427 = vld [vmem:[%s373 + $0x28] sm:$0xff]
        %v428 = vld [vmem:[%s373 + $0x30] sm:$0xff]
        %v429 = vld [vmem:[%s373 + $0x38] sm:$0xff]
        %v430 = vld [vmem:[%s385] sm:$0xff]
        %v431 = vld [vmem:[%s385 + $0x8] sm:$0xff]
        %v432 = vld [vmem:[%s385 + $0x10] sm:$0xff]
        %v433 = vld [vmem:[%s385 + $0x18] sm:$0xff]
        %v434 = vld [vmem:[%s385 + $0x20] sm:$0xff]
        %v435 = vld [vmem:[%s385 + $0x28] sm:$0xff]
        %v436 = vld [vmem:[%s385 + $0x30] sm:$0xff]
        %v437 = vld [vmem:[%s385 + $0x38] sm:$0xff]
        %vm438 = vcmask 261120
        %v440 = vsel %vm438, %v412, 0
        %v443 = vsel %vm438, %v413, 0
        %v446 = vsel %vm438, %v414, 0
        %v449 = vsel %vm438, %v415, 0
        %v452 = vsel %vm438, %v416, 0
        %v455 = vsel %vm438, %v417, 0
        %v458 = vsel %vm438, %v418, 0
        %v461 = vsel %vm438, %v419, 0
        %v464 = vsel %vm438, %v420, 0
        %v467 = vsel %vm438, %v421, 0
        %469 = vmatprep.subr.mxu0 0.0
        %470 = vmatpush1.xpose.msra.mxu0 0.0
        %471 = vmatprep.subr.mxu0 0.0
        %472 = vmatpush1.xpose.msra.mxu0 0.0
        %473 = vmatprep.subr.mxu0 0.0
        %474 = vmatpush1.xpose.msra.mxu0 0.0
        %475 = vmatprep.subr.mxu0 0.0
        %476 = vmatpush1.xpose.msra.mxu0 0.0
        %477 = vmatprep.subr.mxu0 0.0
        %478 = vmatpush1.xpose.msra.mxu0 0.0
        %479 = vmatprep.subr.mxu0 0.0
        %480 = vmatpush1.xpose.msra.mxu0 0.0
        %481 = vmatprep.subr.mxu0 0.0
        %482 = vmatpush1.xpose.msra.mxu0 0.0
        %483 = vmatprep.subr.mxu0 0.0
        %484 = vmatpush1.xpose.msra.mxu0 0.0
        %485 = vmatprep.subr.mxu0 0.0
        %486 = vmatpush1.xpose.msra.mxu0 %v467
        %487 = vmatprep.subr.mxu0 0.0
        %488 = vmatpush1.xpose.msra.mxu0 %v464
        %489 = vmatprep.subr.mxu0 0.0
        %490 = vmatpush1.xpose.msra.mxu0 %v461
        %491 = vmatprep.subr.mxu0 0.0
        %492 = vmatpush1.xpose.msra.mxu0 %v458
        %493 = vmatprep.subr.mxu0 0.0
        %494 = vmatpush1.xpose.msra.mxu0 %v455
        %495 = vmatprep.subr.mxu0 0.0
        %496 = vmatpush1.xpose.msra.mxu0 %v452
        %497 = vmatprep.subr.mxu0 0.0
        %498 = vmatpush1.xpose.msra.mxu0 %v449
        %499 = vmatprep.subr.mxu0 0.0
        %500 = vmatpush1.xpose.msra.mxu0 %v446
        %501 = vmatprep.subr.mxu0 0.0
        %502 = vmatpush2.xpose.msra.mxu0 0.0
        %503 = vmatprep.subr.mxu0 0.0
        %504 = vmatpush2.xpose.msra.mxu0 0.0
        %505 = vmatprep.subr.mxu0 0.0
        %506 = vmatpush2.xpose.msra.mxu0 0.0
        %507 = vmatprep.subr.mxu0 0.0
        %508 = vmatpush2.xpose.msra.mxu0 0.0
        %509 = vmatprep.subr.mxu0 0.0
        %510 = vmatpush2.xpose.msra.mxu0 0.0
        %511 = vmatprep.subr.mxu0 0.0
        %512 = vmatpush2.xpose.msra.mxu0 0.0
        %513 = vmatprep.subr.mxu0 0.0
        %514 = vmatpush2.xpose.msra.mxu0 0.0
        %515 = vmatprep.subr.mxu0 0.0
        %516 = vmatpush2.xpose.msra.mxu0 0.0
        %517 = vmatprep.subr.mxu0 0.0
        %518 = vmatpush2.xpose.msra.mxu0 0.0
        %519 = vmatprep.subr.mxu0 0.0
        %520 = vmatpush2.xpose.msra.mxu0 0.0
        %521 = vmatprep.subr.mxu0 0.0
        %522 = vmatpush2.xpose.msra.mxu0 0.0
        %523 = vmatprep.subr.mxu0 0.0
        %524 = vmatpush2.xpose.msra.mxu0 0.0
        %525 = vmatprep.subr.mxu0 0.0
        %526 = vmatpush2.xpose.msra.mxu0 0.0
        %527 = vmatprep.subr.mxu0 0.0
        %528 = vmatpush2.xpose.msra.mxu0 0.0
        %529 = vmatprep.subr.mxu0 0.0
        %530 = vmatpush2.xpose.msra.mxu0 0.0
        %531 = vmatprep.subr.mxu0 0.0
        %532 = vmatpush2.xpose.msra.mxu0 0.0
        %533 = vmatprep.mubr.f32.mxu0 0.0
        %534 = vmatmul.mubr.f32.gmra.mxu0 %v440
        %v535 = vpop.f32.mrf.mxu0
        %v536 = vadd.f32 0.0, %v535
        %v537 = vpop.f32.mrf.mxu0
        %538 = vmatprep.mubr.f32.mxu0 0.0
        %539 = vmatmul.mubr.f32.gmra.mxu0 %v443
        %v540 = vpop.f32.mrf.mxu0
        %v541 = vadd.f32 0.0, %v540
        %v542 = vpop.f32.mrf.mxu0
        %543 = vdwg.mxu0
        %v545 = vsel %vm438, %v422, 0
        %v548 = vsel %vm438, %v423, 0
        %v551 = vsel %vm438, %v424, 0
        %v554 = vsel %vm438, %v425, 0
        %v557 = vsel %vm438, %v426, 0
        %v560 = vsel %vm438, %v427, 0
        %v563 = vsel %vm438, %v428, 0
        %v566 = vsel %vm438, %v429, 0
        %568 = vmatprep.subr.mxu0 0.0
        %569 = vmatpush1.xpose.msra.mxu0 0.0
        %570 = vmatprep.subr.mxu0 0.0
        %571 = vmatpush1.xpose.msra.mxu0 0.0
        %572 = vmatprep.subr.mxu0 0.0
        %573 = vmatpush1.xpose.msra.mxu0 0.0
        %574 = vmatprep.subr.mxu0 0.0
        %575 = vmatpush1.xpose.msra.mxu0 0.0
        %576 = vmatprep.subr.mxu0 0.0
        %577 = vmatpush1.xpose.msra.mxu0 0.0
        %578 = vmatprep.subr.mxu0 0.0
        %579 = vmatpush1.xpose.msra.mxu0 0.0
        %580 = vmatprep.subr.mxu0 0.0
        %581 = vmatpush1.xpose.msra.mxu0 0.0
        %582 = vmatprep.subr.mxu0 0.0
        %583 = vmatpush1.xpose.msra.mxu0 0.0
        %584 = vmatprep.subr.mxu0 0.0
        %585 = vmatpush1.xpose.msra.mxu0 %v566
        %586 = vmatprep.subr.mxu0 0.0
        %587 = vmatpush1.xpose.msra.mxu0 %v563
        %588 = vmatprep.subr.mxu0 0.0
        %589 = vmatpush1.xpose.msra.mxu0 %v560
        %590 = vmatprep.subr.mxu0 0.0
        %591 = vmatpush1.xpose.msra.mxu0 %v557
        %592 = vmatprep.subr.mxu0 0.0
        %593 = vmatpush1.xpose.msra.mxu0 %v554
        %594 = vmatprep.subr.mxu0 0.0
        %595 = vmatpush1.xpose.msra.mxu0 %v551
        %596 = vmatprep.subr.mxu0 0.0
        %597 = vmatpush1.xpose.msra.mxu0 %v548
        %598 = vmatprep.subr.mxu0 0.0
        %599 = vmatpush1.xpose.msra.mxu0 %v545
        %600 = vmatprep.subr.mxu0 0.0
        %601 = vmatpush2.xpose.msra.mxu0 0.0
        %602 = vmatprep.subr.mxu0 0.0
        %603 = vmatpush2.xpose.msra.mxu0 0.0
        %604 = vmatprep.subr.mxu0 0.0
        %605 = vmatpush2.xpose.msra.mxu0 0.0
        %606 = vmatprep.subr.mxu0 0.0
        %607 = vmatpush2.xpose.msra.mxu0 0.0
        %608 = vmatprep.subr.mxu0 0.0
        %609 = vmatpush2.xpose.msra.mxu0 0.0
        %610 = vmatprep.subr.mxu0 0.0
        %611 = vmatpush2.xpose.msra.mxu0 0.0
        %612 = vmatprep.subr.mxu0 0.0
        %613 = vmatpush2.xpose.msra.mxu0 0.0
        %614 = vmatprep.subr.mxu0 0.0
        %615 = vmatpush2.xpose.msra.mxu0 0.0
        %616 = vmatprep.subr.mxu0 0.0
        %617 = vmatpush2.xpose.msra.mxu0 0.0
        %618 = vmatprep.subr.mxu0 0.0
        %619 = vmatpush2.xpose.msra.mxu0 0.0
        %620 = vmatprep.subr.mxu0 0.0
        %621 = vmatpush2.xpose.msra.mxu0 0.0
        %622 = vmatprep.subr.mxu0 0.0
        %623 = vmatpush2.xpose.msra.mxu0 0.0
        %624 = vmatprep.subr.mxu0 0.0
        %625 = vmatpush2.xpose.msra.mxu0 0.0
        %626 = vmatprep.subr.mxu0 0.0
        %627 = vmatpush2.xpose.msra.mxu0 0.0
        %628 = vmatprep.subr.mxu0 0.0
        %629 = vmatpush2.xpose.msra.mxu0 0.0
        %630 = vmatprep.subr.mxu0 0.0
        %631 = vmatpush2.xpose.msra.mxu0 0.0
        %632 = vmatprep.mubr.f32.mxu0 0.0
        %633 = vmatmul.mubr.f32.gmra.mxu0 %v440
        %v634 = vpop.f32.mrf.mxu0
        %v635 = vadd.f32 0.0, %v634
        %v636 = vpop.f32.mrf.mxu0
        %637 = vmatprep.mubr.f32.mxu0 0.0
        %638 = vmatmul.mubr.f32.gmra.mxu0 %v443
        %v639 = vpop.f32.mrf.mxu0
        %v640 = vadd.f32 0.0, %v639
        %v641 = vpop.f32.mrf.mxu0
        %642 = vdwg.mxu0
        %v643 = vxor.u32 %v536, 2147483648
        %v644 = vxor.u32 %v541, 2147483648
        %v645 = vmul.f32 %v643, 1.442695
        %v646 = vpow.pop %v645
        %v647 = vmul.f32 %v644, 1.442695
        %v648 = vpow.pop %v647
        %v649 = vadd.f32 %v646, 1.0
        %v650 = vadd.f32 %v648, 1.0
        %v651 = vrcp.pop %v649
        %v652 = vmul.f32 1.0, %v651
        %v653 = vrcp.pop %v650
        %v654 = vmul.f32 1.0, %v653
        %v655 = vmul.f32 %v536, %v652
        %v656 = vmul.f32 %v541, %v654
        %v657 = vmul.f32 %v655, %v635
        %v658 = vmul.f32 %v656, %v640
        %v659 = vld [vmem:[%s392] sm:$0xff]
        %v660 = vld [vmem:[%s392 + $0x8] sm:$0xff]
        %662 = vset.pattern.permute.xlu0 0
        %663 = vperm.xlu0 %662, %v659
        %v664 = vpop.permute.xlu0 %663
        %667 = vset.pattern.permute.xlu0 0
        %668 = vperm.xlu0 %667, %v660
        %v669 = vpop.permute.xlu0 %668
        %v671 = vmul.f32 %v657, %v664
        %v672 = vmul.f32 %v658, %v669
        %v673 = vld [vmem:[#allocation2] sm:$0xff]
        %v674 = vld [vmem:[#allocation2 + $0x8] sm:$0xff]
        %vm675 = vcmask 523264
        %v677 = vsel %vm675, %v671, 0
        %v680 = vsel %vm675, %v672, 0
        %682 = vmatprep.subr.mxu0 0.0
        %683 = vmatpush1.msra.mxu0 0.0
        %684 = vmatprep.subr.mxu0 0.0
        %685 = vmatpush1.msra.mxu0 0.0
        %686 = vmatprep.subr.mxu0 0.0
        %687 = vmatpush1.msra.mxu0 0.0
        %688 = vmatprep.subr.mxu0 0.0
        %689 = vmatpush1.msra.mxu0 0.0
        %690 = vmatprep.subr.mxu0 0.0
        %691 = vmatpush1.msra.mxu0 0.0
        %692 = vmatprep.subr.mxu0 0.0
        %693 = vmatpush1.msra.mxu0 0.0
        %694 = vmatprep.subr.mxu0 0.0
        %695 = vmatpush1.msra.mxu0 0.0
        %696 = vmatprep.subr.mxu0 0.0
        %697 = vmatpush1.msra.mxu0 0.0
        %698 = vmatprep.subr.mxu0 0.0
        %699 = vmatpush1.msra.mxu0 %v437
        %700 = vmatprep.subr.mxu0 0.0
        %701 = vmatpush1.msra.mxu0 %v436
        %702 = vmatprep.subr.mxu0 0.0
        %703 = vmatpush1.msra.mxu0 %v435
        %704 = vmatprep.subr.mxu0 0.0
        %705 = vmatpush1.msra.mxu0 %v434
        %706 = vmatprep.subr.mxu0 0.0
        %707 = vmatpush1.msra.mxu0 %v433
        %708 = vmatprep.subr.mxu0 0.0
        %709 = vmatpush1.msra.mxu0 %v432
        %710 = vmatprep.subr.mxu0 0.0
        %711 = vmatpush1.msra.mxu0 %v431
        %712 = vmatprep.subr.mxu0 0.0
        %713 = vmatpush1.msra.mxu0 %v430
        %714 = vmatprep.subr.mxu0 0.0
        %715 = vmatpush2.msra.mxu0 0.0
        %716 = vmatprep.subr.mxu0 0.0
        %717 = vmatpush2.msra.mxu0 0.0
        %718 = vmatprep.subr.mxu0 0.0
        %719 = vmatpush2.msra.mxu0 0.0
        %720 = vmatprep.subr.mxu0 0.0
        %721 = vmatpush2.msra.mxu0 0.0
        %722 = vmatprep.subr.mxu0 0.0
        %723 = vmatpush2.msra.mxu0 0.0
        %724 = vmatprep.subr.mxu0 0.0
        %725 = vmatpush2.msra.mxu0 0.0
        %726 = vmatprep.subr.mxu0 0.0
        %727 = vmatpush2.msra.mxu0 0.0
        %728 = vmatprep.subr.mxu0 0.0
        %729 = vmatpush2.msra.mxu0 0.0
        %730 = vmatprep.subr.mxu0 0.0
        %731 = vmatpush2.msra.mxu0 0.0
        %732 = vmatprep.subr.mxu0 0.0
        %733 = vmatpush2.msra.mxu0 0.0
        %734 = vmatprep.subr.mxu0 0.0
        %735 = vmatpush2.msra.mxu0 0.0
        %736 = vmatprep.subr.mxu0 0.0
        %737 = vmatpush2.msra.mxu0 0.0
        %738 = vmatprep.subr.mxu0 0.0
        %739 = vmatpush2.msra.mxu0 0.0
        %740 = vmatprep.subr.mxu0 0.0
        %741 = vmatpush2.msra.mxu0 0.0
        %742 = vmatprep.subr.mxu0 0.0
        %743 = vmatpush2.msra.mxu0 0.0
        %744 = vmatprep.subr.mxu0 0.0
        %745 = vmatpush2.msra.mxu0 0.0
        %746 = vmatprep.mubr.f32.mxu0 0.0
        %747 = vmatmul.mubr.f32.gmra.mxu0 %v677
        %v748 = vpop.f32.mrf.mxu0
        %v749 = vadd.f32 0.0, %v748
        %v750 = vpop.f32.mrf.mxu0
        %751 = vmatprep.mubr.f32.mxu0 0.0
        %752 = vmatmul.mubr.f32.gmra.mxu0 %v680
        %v753 = vpop.f32.mrf.mxu0
        %v754 = vadd.f32 0.0, %v753
        %v755 = vpop.f32.mrf.mxu0
        %756 = vdwg.mxu0
        %v757 = vadd.f32 %v673, %v749
        %v758 = vadd.f32 %v674, %v754
        %759 = vst.msk [vmem:[#allocation2] sm:$0xff] %vm438, %v757
        %760 = vst.msk [vmem:[#allocation2 + $0x8] sm:$0xff] %vm438, %v758
      $region48: #{tpu_custom_call.1} parent=39 // pred_fallthru
        _
      // Predicated region
      $region49: #{tpu_custom_call.1} parent=39 // pred_check
        %p761 = pneg %p400
      $region50: #{tpu_custom_call.1} parent=39 // pred_check_branch
        %763 = sbr.rel (%p761) target = $region52
      $region51: #{tpu_custom_call.1} parent=39 // pred_region
        %v764 = vld [vmem:[#allocation2] sm:$0xff]
        %v765 = vld [vmem:[#allocation2 + $0x8] sm:$0xff]
        %vm766 = vcmask 261120
        %767 = vst.msk [vmem:[%s398] sm:$0xff] %vm766, %v764
        %768 = vst.msk [vmem:[%s398 + $0x8] sm:$0xff] %vm766, %v765
      $region52: #{tpu_custom_call.1} parent=39 // pred_fallthru
        _
      %s769 = smul.u32 2, %s29
      %p770 = scmp.lt.s32.totalorder %s769, 11
      %s771 = scalar_select %p770, %s769, 11
      %s772 = smul.addr %s771, 8
      %s773 = scalar_lea.vmem %s7, %s772
      // Predicated region
      $region53: #{tpu_custom_call.1} parent=39 // pred_check
        %p774 = pneg %p197
      $region54: #{tpu_custom_call.1} parent=39 // pred_check_branch
        %776 = sbr.rel (%p774) target = $region56
      $region55: #{tpu_custom_call.1} parent=39 // pred_region
        %s777 = smul.u32 2, %s29
      $region56: #{tpu_custom_call.1} parent=39 // pred_fallthru
        _
    $region40: #{tpu_custom_call.1} parent=5 // pred_fallthru
      _
    %p778 = scmp.le.s32.totalorder 2, %s20
    // Predicated region
    $region57: #{tpu_custom_call.1} parent=5 // pred_check
      %p779 = pneg %p778
    $region58: #{tpu_custom_call.1} parent=5 // pred_check_branch
      %781 = sbr.rel (%p779) target = $region60
    $region59: #{tpu_custom_call.1} parent=5 // pred_region
      %s782 = ssub.s32 %s20, 2
      // Predicated region
      $region61: #{tpu_custom_call.1} parent=59 // pred_check
        %p783 = pneg %p203
      $region62: #{tpu_custom_call.1} parent=59 // pred_check_branch
        %785 = sbr.rel (%p783) target = $region64
      $region63: #{tpu_custom_call.1} parent=59 // pred_region
        %s786 = smul.u32 2, %s31
        %p787 = scmp.lt.s32.totalorder %s786, 11
        %s788 = scalar_select %p787, %s786, 11
        %s789 = smul.addr %s788, 8
        %s790 = scalar_lea.vmem %s7, %s789
      $region64: #{tpu_custom_call.1} parent=59 // pred_fallthru
        _
    $region60: #{tpu_custom_call.1} parent=5 // pred_fallthru
      _
  $region6: #{tpu_custom_call.1} parent=0 // loop_footer
    %s24 = sadd.s32 1, %s20
  $region7: #{tpu_custom_call.1} parent=0 // loop_footer_branch
    %19 = sbr.rel target = $region3
  $region8: #{tpu_custom_call.1} parent=0 // loop_exit
    _

</llo_original>
